<compile_context>
chip_gen: v5e
topology: v5e:2x2
jax: 0.10.0
libtpu: 0.0.40
codegen_flags: <defaults>
</compile_context>

<pallas_src>
import jax
import jax.numpy as jnp
from jax.experimental import pallas as pl
from jax.experimental.pallas import tpu as pltpu

_LANES = 128   # lane-dense output width; only column 0 is the real logit
_TM_MAX = 256  # row-tile cap: 2 x (256 x 8192) bf16 buffers = 8 MiB double-buffered


def _round_up(x, m):
    return ((x + m - 1) // m) * m


def _conv_logits_kernel(x_ref, w_ref, b_ref, out_ref):
    # x_ref: (TM, K) patch rows (f32 or bf16), w_ref: (1, K) filter (f32, resident),
    # b_ref: (1, 1) bias in SMEM, out_ref: (TM, 128) f32.
    x = x_ref[...].astype(jnp.float32)
    w = w_ref[...].astype(jnp.float32)
    # Single output channel => VPU multiply + lane-reduce (no 128x-padded MXU RHS).
    logit = jnp.sum(x * w, axis=-1, keepdims=True) + b_ref[0, 0]   # (TM, 1) f32
    out_ref[...] = jnp.broadcast_to(jax.nn.sigmoid(logit), out_ref.shape)


@jax.jit
def d_get_logits_forward(h_code, weight, bias):
    """Sigmoid(Conv2d(C -> 1, kernel=4, stride=2, no padding)(h_code)).

    h_code: (B, C, H, W) f32 NCHW, weight: (1, C, 4, 4) OIHW, bias: (1,).
    Returns (B, 1, OH, OW) f32.
    """
    B, C, H, W = h_code.shape
    KH = KW = 4
    stride = 2
    OH = (H - KH) // stride + 1
    OW = (W - KW) // stride + 1
    K = C * KH * KW

    if H == KH and W == KW:
        # OH == OW == 1: the conv is one full contraction per batch element.
        # Zero-copy reshape, stay in f32 (casting to bf16 here would add an HBM pass).
        rows = h_code.reshape(B, K)
    else:
        # Compact 16-tap strided-slice im2col, emitted directly in bf16 so the
        # unavoidable patch-matrix copy (and the kernel's read) is half-width.
        # Feature order is (c, kh, kw), matching OIHW weight flattening.
        # TODO(synk): for very large PatchGAN maps, move patch extraction in-kernel
        # with a grid over (oh, ow) and an index_map on an NHWC-transposed input.
        x16 = h_code.astype(jnp.bfloat16)
        taps = []
        for kh in range(KH):
            for kw in range(KW):
                taps.append(jax.lax.slice(
                    x16,
                    (0, 0, kh, kw),
                    (B, C, kh + (OH - 1) * stride + 1, kw + (OW - 1) * stride + 1),
                    (1, 1, stride, stride)))                      # (B, C, OH, OW)
        rows = (jnp.stack(taps, axis=0)                           # (16, B, C, OH, OW)
                .transpose(1, 3, 4, 2, 0)                         # (B, OH, OW, C, 16)
                .reshape(B * OH * OW, K))

    M = rows.shape[0]
    w_row = weight.reshape(1, K).astype(jnp.float32)              # (1, K) row, tiny
    b_smem = bias.reshape(1, 1).astype(jnp.float32)

    # K = ndf*128 is already lane-aligned; this pad is a no-op unless a caller hands
    # us an odd channel count (no second full copy of the patch matrix in the normal case).
    K_pad = _round_up(K, _LANES)
    if K_pad != K:
        rows = jnp.pad(rows, ((0, 0), (0, K_pad - K)))
        w_row = jnp.pad(w_row, ((0, 0), (0, K_pad - K)))

    # Pad rows only (sublane alignment / tile multiple); padded rows are sliced off.
    M_pad8 = max(8, _round_up(M, 8))
    if M_pad8 <= _TM_MAX:
        TM, M_pad = M_pad8, M_pad8
    else:
        TM, M_pad = _TM_MAX, _round_up(M, _TM_MAX)
    if M_pad != M:
        rows = jnp.pad(rows, ((0, M_pad - M), (0, 0)))

    out_padded = pl.pallas_call(
        _conv_logits_kernel,
        out_shape=jax.ShapeDtypeStruct((M_pad, _LANES), jnp.float32),
        grid=(M_pad // TM,),
        in_specs=[
            pl.BlockSpec((TM, K_pad), lambda i: (i, 0)),          # pipelined patch tiles
            pl.BlockSpec((1, K_pad), lambda i: (0, 0)),           # filter stays resident
            pl.BlockSpec(memory_space=pltpu.MemorySpace.SMEM),    # scalar bias
        ],
        out_specs=pl.BlockSpec((TM, _LANES), lambda i: (i, 0)),   # lane-dense store
        compiler_params=pltpu.CompilerParams(
            dimension_semantics=("parallel",)),
    )(rows, w_row, b_smem)

    # Slice away padding, restore NCHW: (B, 1, OH, OW).
    return out_padded[:M, 0].reshape(B, OH, OW)[:, None, :, :]


if __name__ == "__main__":
    ndf = 4
    C = ndf * 8                                  # D_GET_LOGITS input channels = ndf*8
    key = jax.random.PRNGKey(0)
    k_x1, k_x2, k_w, k_b = jax.random.split(key, 4)
    weight = 0.05 * jax.random.normal(k_w, (1, C, 4, 4), dtype=jnp.float32)   # OIHW
    bias = 0.1 * jax.random.normal(k_b, (1,), dtype=jnp.float32)

    def reference(h, w, b):
        r = jax.lax.conv_general_dilated(
            h, w, window_strides=(2, 2), padding="VALID",
            dimension_numbers=("NCHW", "OIHW", "NCHW"),
            precision=jax.lax.Precision.HIGHEST)
        return jax.nn.sigmoid(r + b.reshape(1, 1, 1, 1))

    # 1) Typical D_GET_LOGITS h_code (4x4 spatial): OH = OW = 1, zero-copy f32 fast path.
    h4 = jax.random.normal(k_x1, (2, C, 4, 4), dtype=jnp.float32)
    out4 = jax.block_until_ready(d_get_logits_forward(h4, weight, bias))
    assert out4.shape == (2, 1, 1, 1), out4.shape
    assert jnp.allclose(out4, reference(h4, weight, bias), atol=1e-4, rtol=1e-4)

    # 2) PAT_D_NET256-style 16x16 feature map: OH = OW = 7, bf16 patch path.
    h16 = jax.random.normal(k_x2, (2, C, 16, 16), dtype=jnp.float32)
    out16 = jax.block_until_ready(d_get_logits_forward(h16, weight, bias))
    ref16 = reference(h16.astype(jnp.bfloat16).astype(jnp.float32), weight, bias)
    assert out16.shape == (2, 1, 7, 7), out16.shape
    assert jnp.allclose(out16, ref16, atol=1e-4, rtol=1e-4)

    print("KERNEL_OK")
</pallas_src>

<mosaic_0001>
module attributes {stable_mosaic.version = 11 : i64} {
  func.func @_conv_logits_kernel(%arg0: i32, %arg1: memref<8x512xf32, #tpu.memory_space<vmem>>, %arg2: memref<1x512xf32, #tpu.memory_space<vmem>>, %arg3: memref<1x1xf32, #tpu.memory_space<smem>>, %arg4: memref<8x128xf32, #tpu.memory_space<vmem>>) attributes {dimension_semantics = [#tpu.dimension_semantics<parallel>], iteration_bounds = array<i64: 1>, scalar_prefetch = 0 : i64, scratch_operands = 0 : i64, tpu.core_type = #tpu.core_type<tc>, window_params = [{transform_indices = @transform_0, window_bounds = array<i64: 8, 512>}, {pipeline_mode = #tpu.pipeline_mode<synchronous>, transform_indices = @transform_1, window_bounds = array<i64: 1, 512>}, {transform_indices = @transform_2, window_bounds = array<i64: 1, 1>}, {transform_indices = @transform_3, window_bounds = array<i64: 8, 128>}]} {
    %c0 = arith.constant 0 : index
    %c0_0 = arith.constant 0 : index
    %0 = vector.load %arg1[%c0, %c0_0] : memref<8x512xf32, #tpu.memory_space<vmem>>, vector<8x512xf32>
    %c0_1 = arith.constant 0 : index
    %c0_2 = arith.constant 0 : index
    %1 = vector.load %arg2[%c0_1, %c0_2] : memref<1x512xf32, #tpu.memory_space<vmem>>, vector<1x512xf32>
    %2 = vector.broadcast %1 : vector<1x512xf32> to vector<8x512xf32>
    %3 = arith.mulf %0, %2 : vector<8x512xf32>
    %cst = arith.constant dense<0.000000e+00> : vector<8xf32>
    %4 = vector.multi_reduction <add>, %3, %cst [1] : vector<8x512xf32> to vector<8xf32>
    %5 = vector.shape_cast %4 : vector<8xf32> to vector<8x1xf32>
    %c0_3 = arith.constant 0 : index
    %c0_4 = arith.constant 0 : index
    %6 = memref.load %arg3[%c0_3, %c0_4] : memref<1x1xf32, #tpu.memory_space<smem>>
    %7 = vector.broadcast %6 : f32 to vector<8x1xf32>
    %8 = arith.addf %5, %7 : vector<8x1xf32>
    %9 = arith.negf %8 : vector<8x1xf32>
    %10 = math.exp %9 : vector<8x1xf32>
    %cst_5 = arith.constant 1.000000e+00 : f32
    %11 = vector.broadcast %cst_5 : f32 to vector<8x1xf32>
    %12 = arith.addf %11, %10 : vector<8x1xf32>
    %13 = arith.divf %11, %12 : vector<8x1xf32>
    %14 = vector.shape_cast %13 : vector<8x1xf32> to vector<8x1xf32>
    %15 = vector.broadcast %14 : vector<8x1xf32> to vector<8x128xf32>
    %c0_6 = arith.constant 0 : index
    %c0_7 = arith.constant 0 : index
    %16 = vector.load %arg4[%c0_6, %c0_7] : memref<8x128xf32, #tpu.memory_space<vmem>>, vector<8x128xf32>
    tpu.vector_store %arg4[%c0_6, %c0_7], %15 {strides = array<i32>} : memref<8x128xf32, #tpu.memory_space<vmem>>, vector<8x128xf32>,
    return
  }
  func.func @transform_0(%arg0: i32) -> (i32, i32) {
    %c0_i32 = arith.constant 0 : i32
    %c0_i32_0 = arith.constant 0 : i32
    return %arg0, %c0_i32 : i32, i32
  }
  func.func @transform_1(%arg0: i32) -> (i32, i32) {
    %c0_i32 = arith.constant 0 : i32
    %c0_i32_0 = arith.constant 0 : i32
    %c0_i32_1 = arith.constant 0 : i32
    return %c0_i32, %c0_i32_0 : i32, i32
  }
  func.func @transform_2(%arg0: i32) -> (i32, i32) {
    %c0_i32 = arith.constant 0 : i32
    %c0_i32_0 = arith.constant 0 : i32
    %c0_i32_1 = arith.constant 0 : i32
    return %c0_i32, %c0_i32_0 : i32, i32
  }
  func.func @transform_3(%arg0: i32) -> (i32, i32) {
    %c0_i32 = arith.constant 0 : i32
    %c0_i32_0 = arith.constant 0 : i32
    return %arg0, %c0_i32 : i32, i32
  }
}

</mosaic_0001>

<llo_original>
// kernel: d_get_logits_forward.1
$region0: #{d_get_logits_forward.1}
  #allocation0 [shape = 'u32[]', space=smem, size = 0x4, offset = 0x4, fixed_abs, tag = 'smem constant byte address 0x4 - core index']
  #allocation1 [shape = 'u32[72,128]{1,0:T(1,128)}', space=vmem, size = 0x9000, scoped, tag = 'internal scratch']
  #allocation2 [shape = 'f32[1,1]{1,0:T(1,128)S(6)}', space=smem, size = 0x200, scoped, tag = 'scoped memory for d_get_logits_forward.1']
  %s0 = inlined_call_operand.vmem [shape: f32[8,512], index: 0, kind: input, shape index: {}]
  %s1 = inlined_call_operand.vmem [shape: f32[1,512], index: 1, kind: input, shape index: {}]
  %s2 = inlined_call_operand.<no memory space> [shape: f32[1,1], index: 2, kind: input, shape index: {}]
  %s3 = inlined_call_operand.vmem [shape: f32[8,128], index: 3, kind: output, shape index: {}]
  %s4 = sld [smem:[#allocation0]]
  $region22: #{d_get_logits_forward.1} parent=0
    _
  %s6 = ssub.s32 1, %s4
  %s7 = scalar_select 0, %s6, %s4
  %8 = sst [smem:[#allocation2]] %s2
  // Predicated region
  $region2: #{d_get_logits_forward.1} parent=0 // pred_check
    _
  $region3: #{d_get_logits_forward.1} parent=0 // pred_check_branch
    %10 = sbr.rel (0) target = $region5
  $region4: #{d_get_logits_forward.1} parent=0 // pred_region
    _
  $region5: #{d_get_logits_forward.1} parent=0 // pred_fallthru
    _
  // Predicated region
  $region6: #{d_get_logits_forward.1} parent=0 // pred_check
    _
  $region7: #{d_get_logits_forward.1} parent=0 // pred_check_branch
    %12 = sbr.rel (0) target = $region9
  $region8: #{d_get_logits_forward.1} parent=0 // pred_region
    _
  $region9: #{d_get_logits_forward.1} parent=0 // pred_fallthru
    _
  // Predicated region
  $region10: #{d_get_logits_forward.1} parent=0 // pred_check
    _
  $region11: #{d_get_logits_forward.1} parent=0 // pred_check_branch
    %14 = sbr.rel (0) target = $region13
  $region12: #{d_get_logits_forward.1} parent=0 // pred_region
    _
  $region13: #{d_get_logits_forward.1} parent=0 // pred_fallthru
    _
  %v15 = vld [vmem:[%s0] sm:$0xff]
  %v16 = vld [vmem:[%s0 + $0x8] sm:$0xff]
  %v17 = vld [vmem:[%s0 + $0x10] sm:$0xff]
  %v18 = vld [vmem:[%s0 + $0x18] sm:$0xff]
  %v19 = vld [vmem:[%s1] sm:$0xf]
  %v21 = vperm.slane %v19, 0
  %v22 = vperm.slane %v19, 1
  %v23 = vperm.slane %v19, 2
  %v24 = vperm.slane %v19, 3
  %v29 = vmul.f32 %v15, %v21
  %v30 = vmul.f32 %v16, %v22
  %v31 = vmul.f32 %v17, %v23
  %v32 = vmul.f32 %v18, %v24
  %v33 = vadd.f32 %v29, %v30
  %v34 = vadd.f32 %v33, %v31
  %v35 = vadd.f32 %v34, %v32
  %36 = vadd.xlane.f32.xlu0 %v35
  %v37 = vpop.xlane.xlu0 %36
  %s38 = sld [smem:[#allocation2]]
  %v39 = vstv %s38
  %v40 = vadd.f32 %v37, %v39
  %v41 = vxor.u32 %v40, 2147483648
  %v42 = vmul.f32 %v41, 1.442695
  %v43 = vpow.pop %v42
  %v44 = vadd.f32 %v43, 1.0
  %v45 = vrcp.pop %v44
  %v46 = vmul.f32 %v44, %v45
  %v47 = vsub.f32 1.0, %v46
  %v48 = vmul.f32 %v45, %v47
  %v49 = vadd.f32 %v45, %v48
  %vm50 = vweird.f32 %v44
  %vm51 = vweird.f32 %v45
  %vm52 = vmor %vm50, %vm51
  %v53 = vsel %vm52, %v45, %v49
  %v54 = vand.u32 2147483647, %v44
  %vm55 = vcmp.eq.f32.partialorder %v54, 8.507059e+37
  %v56 = vand.u32 %v44, 2147483648
  %v57 = vor.u32 1.1754944e-38, %v56
  %v58 = vsel %vm55, %v57, %v53
  %v59 = vmul.f32 1.0, %v58
  %60 = vst [vmem:[%s3] sm:$0xff] %v59
  // Predicated region
  $region14: #{d_get_logits_forward.1} parent=0 // pred_check
    _
  $region15: #{d_get_logits_forward.1} parent=0 // pred_check_branch
    %62 = sbr.rel (0) target = $region17
  $region16: #{d_get_logits_forward.1} parent=0 // pred_region
    _
  $region17: #{d_get_logits_forward.1} parent=0 // pred_fallthru
    _
  // Predicated region
  $region18: #{d_get_logits_forward.1} parent=0 // pred_check
    _
  $region19: #{d_get_logits_forward.1} parent=0 // pred_check_branch
    %64 = sbr.rel (0) target = $region21
  $region20: #{d_get_logits_forward.1} parent=0 // pred_region
    _
  $region21: #{d_get_logits_forward.1} parent=0 // pred_fallthru
    _

</llo_original>
